<compile_context>
chip_gen: v7x
topology: tpu7x:2x2x1
jax: 0.10.0
libtpu: 0.0.40
codegen_flags: <defaults>
</compile_context>

<pallas_src>
import functools

import jax
import jax.numpy as jnp
from jax.experimental import pallas as pl
from jax.experimental.pallas import tpu as pltpu

_LANE = 128


def _dice_partial_kernel(pred_ref, lbl_ref, out_ref, *, class_ids, mask_invalid):
    """One (split, batch, row-tile) step.

    pred_ref: (K, rt, 128) logits (model dtype)
    lbl_ref:  (rt, 128) int8/int32 raw labels (-1 marks padded pixels)
    out_ref:  (3, K, 128) f32 resident lane partials [sum(sm*t), sum(sm), sum(t)]
    """
    t_idx = pl.program_id(2)

    @pl.when(t_idx == 0)
    def _():
        out_ref[...] = jnp.zeros_like(out_ref)

    p = pred_ref[...].astype(jnp.float32)          # cast in VMEM, not in HBM
    lbl = lbl_ref[...].astype(jnp.int32)           # (rt, 128)

    # softmax over the selected-class axis (== F.softmax(pred[:, class_ids], 1))
    m = jnp.max(p, axis=0, keepdims=True)
    e = jnp.exp(p - m)                             # (K, rt, 128)
    inv = 1.0 / jnp.sum(e, axis=0)                 # one divide per pixel (not K)
    if mask_invalid:
        # Padded pixels carry label -1: kill their softmax contribution once.
        inv = jnp.where(lbl >= 0, inv, 0.0)

    # Unrolled per-class accumulation; cross-lane (axis=-1) reduction deferred
    # to the wrapper so the inner loop stays VPU-only with lane-dense stores.
    inter_rows, sm_rows, tgt_rows = [], [], []
    for k, c in enumerate(class_ids):
        sm_k = e[k] * inv                          # (rt, 128)
        hit = lbl == c
        inter_rows.append(jnp.sum(jnp.where(hit, sm_k, 0.0), axis=0, keepdims=True))
        sm_rows.append(jnp.sum(sm_k, axis=0, keepdims=True))
        tgt_rows.append(jnp.sum(hit.astype(jnp.float32), axis=0, keepdims=True))

    part = jnp.stack([jnp.concatenate(inter_rows, axis=0),
                      jnp.concatenate(sm_rows, axis=0),
                      jnp.concatenate(tgt_rows, axis=0)], axis=0)   # (3, K, 128)
    out_ref[...] += part


def custom_soft_dice_loss(pred, target, *, num_classes, class_ids,
                          row_tile_cap=512, num_splits=None):
    """pred: (B, C, H, W) float logits; target: (B, H, W) int class labels."""
    B, C, H, W = pred.shape
    class_ids = tuple(int(c) for c in class_ids)
    K = len(class_ids)
    N = H * W

    # Lane-dense spatial layout: N -> (R, 128) rows.
    r_raw = -(-N // _LANE)                         # ceil(N / 128)
    if r_raw <= row_tile_cap:
        row_tile = r_raw                           # single tile == full dim -> legal block
    else:
        # Multiple of 32 keeps int8 (32,128) / bf16 (16,128) / f32 (8,128) min tiles legal.
        row_tile = max(32, (row_tile_cap // 32) * 32)
    tiles_raw = -(-r_raw // row_tile)

    # On v7x (2 TCs/chip) a B==1 call would otherwise occupy a single core on a
    # bandwidth-bound kernel; split the row range so both cores share it.
    if num_splits is None:
        num_splits = 2 if (B == 1 and tiles_raw >= 2) else 1
    num_splits = max(1, min(int(num_splits), tiles_raw))

    tiles_per_split = -(-tiles_raw // num_splits)
    r_total = num_splits * tiles_per_split * row_tile
    pad = r_total * _LANE - N

    # Pre-slice to the K selected channels keeping the model dtype (no f32
    # upcast in HBM); labels go int8 when the class ids fit.
    cid = jnp.asarray(class_ids, dtype=jnp.int32)
    pred_k = jnp.take(pred, cid, axis=1).reshape(B, K, N)
    lbl_dtype = jnp.int8 if num_classes <= 127 else jnp.int32
    lbl = target.astype(lbl_dtype).reshape(B, N)
    if pad:
        pred_k = jnp.pad(pred_k, ((0, 0), (0, 0), (0, pad)))
        lbl = jnp.pad(lbl, ((0, 0), (0, pad)), constant_values=-1)
    pred_k = pred_k.reshape(B, K, r_total, _LANE)
    lbl = lbl.reshape(B, r_total, _LANE)

    kernel = functools.partial(_dice_partial_kernel,
                               class_ids=class_ids, mask_invalid=pad > 0)

    partials = pl.pallas_call(
        kernel,
        out_shape=jax.ShapeDtypeStruct((num_splits, B, 3, K, _LANE), jnp.float32),
        grid_spec=pltpu.PrefetchScalarGridSpec(
            num_scalar_prefetch=0,
            grid=(num_splits, B, tiles_per_split),    # reduction (row-tile) axis last
            in_specs=[
                pl.BlockSpec((None, K, row_tile, _LANE),
                             lambda s, b, t: (b, 0, s * tiles_per_split + t, 0)),
                pl.BlockSpec((None, row_tile, _LANE),
                             lambda s, b, t: (b, s * tiles_per_split + t, 0)),
            ],
            out_specs=pl.BlockSpec((None, None, 3, K, _LANE),
                                   lambda s, b, t: (s, b, 0, 0, 0)),
        ),
        compiler_params=pltpu.CompilerParams(
            dimension_semantics=("parallel", "parallel", "arbitrary"),
            # v7x-safe scoped budget: with the K-channel pre-slice, row_tile=512
            # double-buffered is well inside 32 MiB on all generations.
            vmem_limit_bytes=32 * 1024 * 1024,
        ),
    )(pred_k, lbl)

    # Tiny finalize in JAX: split + lane reduction; smooth added exactly once.
    smooth = 0.01
    sums = jnp.sum(partials, axis=(0, 4))             # (B, 3, K)
    inter = sums[:, 0, :] + smooth
    union = sums[:, 1, :] + sums[:, 2, :] + smooth
    score = jnp.sum(2.0 * inter / union)
    return 1.0 - score / (float(B) * float(num_classes))


def _reference(pred, target, *, num_classes, class_ids):
    # Pure-JAX reference mirroring the PyTorch forward.
    smooth = 0.01
    B = pred.shape[0]
    K = len(class_ids)
    cid = jnp.asarray(class_ids)
    p = jax.nn.softmax(jnp.take(pred.astype(jnp.float32), cid, axis=1), axis=1)
    p = p.reshape(B, K, -1)
    t = jax.nn.one_hot(target, num_classes, dtype=jnp.float32)
    t = jnp.transpose(t, (0, 3, 1, 2)).reshape(B, num_classes, -1)
    t = jnp.take(t, cid, axis=1)
    inter = jnp.sum(p * t, axis=2) + smooth
    union = jnp.sum(p, axis=2) + jnp.sum(t, axis=2) + smooth
    score = jnp.sum(2.0 * inter / union)
    return 1.0 - score / (float(B) * float(num_classes))


if __name__ == "__main__":
    # Deterministic synthetic config (module __init__ args).
    num_classes = 4
    class_ids = (1, 2, 3)

    key = jax.random.PRNGKey(0)
    kp, kt, kp2, kt2, kp3, kt3 = jax.random.split(key, 6)

    # ---- Test 1: module-sized shapes, f32, single lane-dense tile ----------
    B, C, H, W = 2, 4, 16, 16
    pred = jax.random.normal(kp, (B, C, H, W), dtype=jnp.float32)
    target = jax.random.randint(kt, (B, H, W), 0, num_classes, dtype=jnp.int32)

    loss_fn = jax.jit(functools.partial(
        custom_soft_dice_loss, num_classes=num_classes, class_ids=class_ids))
    loss = jax.block_until_ready(loss_fn(pred, target))
    ref = _reference(pred, target, num_classes=num_classes, class_ids=class_ids)
    assert jnp.allclose(loss, ref, atol=1e-5, rtol=1e-5), (loss, ref)

    # ---- Test 2: B=1 -> dual-split grid + multi-tile pipelined reduction ---
    B2, H2, W2 = 1, 128, 128
    pred2 = jax.random.normal(kp2, (B2, C, H2, W2), dtype=jnp.float32)
    target2 = jax.random.randint(kt2, (B2, H2, W2), 0, num_classes, dtype=jnp.int32)
    loss_fn2 = jax.jit(functools.partial(
        custom_soft_dice_loss, num_classes=num_classes, class_ids=class_ids,
        row_tile_cap=32))
    loss2 = jax.block_until_ready(loss_fn2(pred2, target2))
    ref2 = _reference(pred2, target2, num_classes=num_classes, class_ids=class_ids)
    assert jnp.allclose(loss2, ref2, atol=1e-4, rtol=1e-4), (loss2, ref2)

    # ---- Test 3: H*W not a multiple of 128 -> padded-pixel masking path ----
    B3, H3, W3 = 2, 10, 10
    pred3 = jax.random.normal(kp3, (B3, C, H3, W3), dtype=jnp.float32)
    target3 = jax.random.randint(kt3, (B3, H3, W3), 0, num_classes, dtype=jnp.int32)
    loss3 = jax.block_until_ready(loss_fn(pred3, target3))
    ref3 = _reference(pred3, target3, num_classes=num_classes, class_ids=class_ids)
    assert jnp.allclose(loss3, ref3, atol=1e-5, rtol=1e-5), (loss3, ref3)

    # ---- Test 4: bf16 logits stay bf16 in HBM, f32 math inside the kernel --
    loss_bf16 = jax.block_until_ready(loss_fn(pred.astype(jnp.bfloat16), target))
    ref_bf16 = _reference(pred.astype(jnp.bfloat16), target,
                          num_classes=num_classes, class_ids=class_ids)
    assert jnp.allclose(loss_bf16, ref_bf16, atol=1e-3, rtol=1e-3), (loss_bf16, ref_bf16)

    print("KERNEL_OK")
</pallas_src>

<mosaic_0001>
module attributes {stable_mosaic.version = 11 : i64} {
  func.func @_dice_partial_kernel(%arg0: i32, %arg1: i32, %arg2: i32, %arg3: memref<1x3x2x128xf32, #tpu.memory_space<vmem>>, %arg4: memref<1x2x128xi8, #tpu.memory_space<vmem>>, %arg5: memref<1x1x3x3x128xf32, #tpu.memory_space<vmem>>) attributes {dimension_semantics = [#tpu.dimension_semantics<parallel>, #tpu.dimension_semantics<parallel>, #tpu.dimension_semantics<arbitrary>], iteration_bounds = array<i64: 1, 2, 1>, scalar_prefetch = 0 : i64, scratch_operands = 0 : i64, tpu.core_type = #tpu.core_type<tc>, window_params = [{transform_indices = @transform_0, window_bounds = array<i64: 1, 3, 2, 128>}, {transform_indices = @transform_1, window_bounds = array<i64: 1, 2, 128>}, {transform_indices = @transform_2, window_bounds = array<i64: 1, 1, 3, 3, 128>}]} {
    %c0_i32 = arith.constant 0 : i32
    %0 = arith.cmpi eq, %arg2, %c0_i32 : i32
    %1 = arith.extui %0 : i1 to i32
    %c0_i32_0 = arith.constant 0 : i32
    %2 = arith.cmpi ne, %1, %c0_i32_0 : i32
    scf.if %2 {
      %cst_31 = arith.constant 0.000000e+00 : f32
      %74 = vector.broadcast %cst_31 : f32 to vector<3x3x128xf32>
      %c0_32 = arith.constant 0 : index
      %c0_33 = arith.constant 0 : index
      %c0_34 = arith.constant 0 : index
      %c0_35 = arith.constant 0 : index
      %c0_36 = arith.constant 0 : index
      %75 = vector.load %arg5[%c0_32, %c0_33, %c0_34, %c0_35, %c0_36] : memref<1x1x3x3x128xf32, #tpu.memory_space<vmem>>, vector<1x1x3x3x128xf32>
      %76 = vector.shape_cast %75 : vector<1x1x3x3x128xf32> to vector<3x3x128xf32>
      %77 = vector.shape_cast %74 : vector<3x3x128xf32> to vector<1x1x3x3x128xf32>
      tpu.vector_store %arg5[%c0_32, %c0_33, %c0_34, %c0_35, %c0_36], %77 {strides = array<i32>} : memref<1x1x3x3x128xf32, #tpu.memory_space<vmem>>, vector<1x1x3x3x128xf32>,
    } else {
    }
    %c0 = arith.constant 0 : index
    %c0_1 = arith.constant 0 : index
    %c0_2 = arith.constant 0 : index
    %c0_3 = arith.constant 0 : index
    %3 = vector.load %arg3[%c0, %c0_1, %c0_2, %c0_3] : memref<1x3x2x128xf32, #tpu.memory_space<vmem>>, vector<1x3x2x128xf32>
    %4 = vector.shape_cast %3 : vector<1x3x2x128xf32> to vector<3x2x128xf32>
    %c0_4 = arith.constant 0 : index
    %c0_5 = arith.constant 0 : index
    %c0_6 = arith.constant 0 : index
    %5 = vector.load %arg4[%c0_4, %c0_5, %c0_6] : memref<1x2x128xi8, #tpu.memory_space<vmem>>, vector<1x2x128xi8>
    %6 = vector.shape_cast %5 : vector<1x2x128xi8> to vector<2x128xi8>
    %7 = arith.extsi %6 : vector<2x128xi8> to vector<2x128xi32>
    %cst = arith.constant dense<0xFF800000> : vector<2x128xf32>
    %8 = vector.multi_reduction <maximumf>, %4, %cst [0] : vector<3x2x128xf32> to vector<2x128xf32>
    %9 = vector.shape_cast %8 : vector<2x128xf32> to vector<1x2x128xf32>
    %10 = vector.broadcast %9 : vector<1x2x128xf32> to vector<3x2x128xf32>
    %11 = arith.subf %4, %10 : vector<3x2x128xf32>
    %12 = math.exp %11 : vector<3x2x128xf32>
    %cst_7 = arith.constant dense<0.000000e+00> : vector<2x128xf32>
    %13 = vector.multi_reduction <add>, %12, %cst_7 [0] : vector<3x2x128xf32> to vector<2x128xf32>
    %cst_8 = arith.constant 1.000000e+00 : f32
    %14 = vector.broadcast %cst_8 : f32 to vector<2x128xf32>
    %15 = arith.divf %14, %13 : vector<2x128xf32>
    %16 = vector.extract_strided_slice %12 {offsets = [0, 0, 0], sizes = [1, 2, 128], strides = [1, 1, 1]} : vector<3x2x128xf32> to vector<1x2x128xf32>
    %17 = vector.shape_cast %16 : vector<1x2x128xf32> to vector<2x128xf32>
    %18 = arith.mulf %17, %15 : vector<2x128xf32>
    %c1_i32 = arith.constant 1 : i32
    %19 = vector.broadcast %c1_i32 : i32 to vector<2x128xi32>
    %20 = arith.cmpi eq, %7, %19 : vector<2x128xi32>
    %cst_9 = arith.constant 0.000000e+00 : f32
    %21 = vector.broadcast %cst_9 : f32 to vector<2x128xf32>
    %22 = arith.select %20, %18, %21 : vector<2x128xi1>, vector<2x128xf32>
    %cst_10 = arith.constant dense<0.000000e+00> : vector<128xf32>
    %23 = vector.multi_reduction <add>, %22, %cst_10 [0] : vector<2x128xf32> to vector<128xf32>
    %24 = vector.shape_cast %23 : vector<128xf32> to vector<1x128xf32>
    %cst_11 = arith.constant dense<0.000000e+00> : vector<128xf32>
    %25 = vector.multi_reduction <add>, %18, %cst_11 [0] : vector<2x128xf32> to vector<128xf32>
    %26 = vector.shape_cast %25 : vector<128xf32> to vector<1x128xf32>
    %27 = arith.extui %20 : vector<2x128xi1> to vector<2x128xi32>
    %28 = arith.sitofp %27 : vector<2x128xi32> to vector<2x128xf32>
    %cst_12 = arith.constant dense<0.000000e+00> : vector<128xf32>
    %29 = vector.multi_reduction <add>, %28, %cst_12 [0] : vector<2x128xf32> to vector<128xf32>
    %30 = vector.shape_cast %29 : vector<128xf32> to vector<1x128xf32>
    %31 = vector.extract_strided_slice %12 {offsets = [1, 0, 0], sizes = [1, 2, 128], strides = [1, 1, 1]} : vector<3x2x128xf32> to vector<1x2x128xf32>
    %32 = vector.shape_cast %31 : vector<1x2x128xf32> to vector<2x128xf32>
    %33 = arith.mulf %32, %15 : vector<2x128xf32>
    %c2_i32 = arith.constant 2 : i32
    %34 = vector.broadcast %c2_i32 : i32 to vector<2x128xi32>
    %35 = arith.cmpi eq, %7, %34 : vector<2x128xi32>
    %cst_13 = arith.constant 0.000000e+00 : f32
    %36 = vector.broadcast %cst_13 : f32 to vector<2x128xf32>
    %37 = arith.select %35, %33, %36 : vector<2x128xi1>, vector<2x128xf32>
    %cst_14 = arith.constant dense<0.000000e+00> : vector<128xf32>
    %38 = vector.multi_reduction <add>, %37, %cst_14 [0] : vector<2x128xf32> to vector<128xf32>
    %39 = vector.shape_cast %38 : vector<128xf32> to vector<1x128xf32>
    %cst_15 = arith.constant dense<0.000000e+00> : vector<128xf32>
    %40 = vector.multi_reduction <add>, %33, %cst_15 [0] : vector<2x128xf32> to vector<128xf32>
    %41 = vector.shape_cast %40 : vector<128xf32> to vector<1x128xf32>
    %42 = arith.extui %35 : vector<2x128xi1> to vector<2x128xi32>
    %43 = arith.sitofp %42 : vector<2x128xi32> to vector<2x128xf32>
    %cst_16 = arith.constant dense<0.000000e+00> : vector<128xf32>
    %44 = vector.multi_reduction <add>, %43, %cst_16 [0] : vector<2x128xf32> to vector<128xf32>
    %45 = vector.shape_cast %44 : vector<128xf32> to vector<1x128xf32>
    %46 = vector.extract_strided_slice %12 {offsets = [2, 0, 0], sizes = [1, 2, 128], strides = [1, 1, 1]} : vector<3x2x128xf32> to vector<1x2x128xf32>
    %47 = vector.shape_cast %46 : vector<1x2x128xf32> to vector<2x128xf32>
    %48 = arith.mulf %47, %15 : vector<2x128xf32>
    %c3_i32 = arith.constant 3 : i32
    %49 = vector.broadcast %c3_i32 : i32 to vector<2x128xi32>
    %50 = arith.cmpi eq, %7, %49 : vector<2x128xi32>
    %cst_17 = arith.constant 0.000000e+00 : f32
    %51 = vector.broadcast %cst_17 : f32 to vector<2x128xf32>
    %52 = arith.select %50, %48, %51 : vector<2x128xi1>, vector<2x128xf32>
    %cst_18 = arith.constant dense<0.000000e+00> : vector<128xf32>
    %53 = vector.multi_reduction <add>, %52, %cst_18 [0] : vector<2x128xf32> to vector<128xf32>
    %54 = vector.shape_cast %53 : vector<128xf32> to vector<1x128xf32>
    %cst_19 = arith.constant dense<0.000000e+00> : vector<128xf32>
    %55 = vector.multi_reduction <add>, %48, %cst_19 [0] : vector<2x128xf32> to vector<128xf32>
    %56 = vector.shape_cast %55 : vector<128xf32> to vector<1x128xf32>
    %57 = arith.extui %50 : vector<2x128xi1> to vector<2x128xi32>
    %58 = arith.sitofp %57 : vector<2x128xi32> to vector<2x128xf32>
    %cst_20 = arith.constant dense<0.000000e+00> : vector<128xf32>
    %59 = vector.multi_reduction <add>, %58, %cst_20 [0] : vector<2x128xf32> to vector<128xf32>
    %60 = vector.shape_cast %59 : vector<128xf32> to vector<1x128xf32>
    %61 = tpu.concatenate %24, %39, %54 in 0 : vector<1x128xf32>, vector<1x128xf32>, vector<1x128xf32> -> vector<3x128xf32>
    %62 = tpu.concatenate %26, %41, %56 in 0 : vector<1x128xf32>, vector<1x128xf32>, vector<1x128xf32> -> vector<3x128xf32>
    %63 = tpu.concatenate %30, %45, %60 in 0 : vector<1x128xf32>, vector<1x128xf32>, vector<1x128xf32> -> vector<3x128xf32>
    %64 = vector.shape_cast %61 : vector<3x128xf32> to vector<1x3x128xf32>
    %65 = vector.shape_cast %62 : vector<3x128xf32> to vector<1x3x128xf32>
    %66 = vector.shape_cast %63 : vector<3x128xf32> to vector<1x3x128xf32>
    %67 = tpu.concatenate %64, %65, %66 in 0 : vector<1x3x128xf32>, vector<1x3x128xf32>, vector<1x3x128xf32> -> vector<3x3x128xf32>
    %c0_21 = arith.constant 0 : index
    %c0_22 = arith.constant 0 : index
    %c0_23 = arith.constant 0 : index
    %c0_24 = arith.constant 0 : index
    %c0_25 = arith.constant 0 : index
    %68 = vector.load %arg5[%c0_21, %c0_22, %c0_23, %c0_24, %c0_25] : memref<1x1x3x3x128xf32, #tpu.memory_space<vmem>>, vector<1x1x3x3x128xf32>
    %69 = vector.shape_cast %68 : vector<1x1x3x3x128xf32> to vector<3x3x128xf32>
    %70 = arith.addf %69, %67 : vector<3x3x128xf32>
    %c0_26 = arith.constant 0 : index
    %c0_27 = arith.constant 0 : index
    %c0_28 = arith.constant 0 : index
    %c0_29 = arith.constant 0 : index
    %c0_30 = arith.constant 0 : index
    %71 = vector.load %arg5[%c0_26, %c0_27, %c0_28, %c0_29, %c0_30] : memref<1x1x3x3x128xf32, #tpu.memory_space<vmem>>, vector<1x1x3x3x128xf32>
    %72 = vector.shape_cast %71 : vector<1x1x3x3x128xf32> to vector<3x3x128xf32>
    %73 = vector.shape_cast %70 : vector<3x3x128xf32> to vector<1x1x3x3x128xf32>
    tpu.vector_store %arg5[%c0_26, %c0_27, %c0_28, %c0_29, %c0_30], %73 {strides = array<i32>} : memref<1x1x3x3x128xf32, #tpu.memory_space<vmem>>, vector<1x1x3x3x128xf32>,
    return
  }
  func.func @transform_0(%arg0: i32, %arg1: i32, %arg2: i32) -> (i32, i32, i32, i32) {
    %c1_i32 = arith.constant 1 : i32
    %0 = arith.muli %arg0, %c1_i32 : i32
    %1 = arith.addi %0, %arg2 : i32
    %c0_i32 = arith.constant 0 : i32
    %c0_i32_0 = arith.constant 0 : i32
    %c0_i32_1 = arith.constant 0 : i32
    return %arg1, %c0_i32, %1, %c0_i32_0 : i32, i32, i32, i32
  }
  func.func @transform_1(%arg0: i32, %arg1: i32, %arg2: i32) -> (i32, i32, i32) {
    %c1_i32 = arith.constant 1 : i32
    %0 = arith.muli %arg0, %c1_i32 : i32
    %1 = arith.addi %0, %arg2 : i32
    %c0_i32 = arith.constant 0 : i32
    %c0_i32_0 = arith.constant 0 : i32
    return %arg1, %1, %c0_i32 : i32, i32, i32
  }
  func.func @transform_2(%arg0: i32, %arg1: i32, %arg2: i32) -> (i32, i32, i32, i32, i32) {
    %c0_i32 = arith.constant 0 : i32
    %c0_i32_0 = arith.constant 0 : i32
    %c0_i32_1 = arith.constant 0 : i32
    %c0_i32_2 = arith.constant 0 : i32
    return %arg0, %arg1, %c0_i32, %c0_i32_0, %c0_i32_1 : i32, i32, i32, i32, i32
  }
}

</mosaic_0001>

<llo_original>
// kernel: custom_soft_dice_loss.1
$region0: #{custom_soft_dice_loss.1}
  #allocation0 [shape = 'u32[]', space=smem, size = 0x4, offset = 0x4, fixed_abs, tag = 'smem constant byte address 0x4 - core index']
  #allocation1 [shape = 'u32[144,128]{1,0:T(1,128)}', space=vmem, size = 0x12000, scoped, tag = 'internal scratch']
  %s0 = inlined_call_operand.vmem [shape: f32[2,3,2,128], index: 0, kind: input, shape index: {}]
  %s1 = inlined_call_operand.vmem [shape: s8[2,2,128], index: 1, kind: input, shape index: {}]
  %s2 = inlined_call_operand.vmem [shape: f32[1,2,3,3,128], index: 2, kind: output, shape index: {}]
  %s3 = sld [smem:[#allocation0]]
  $region45: #{custom_soft_dice_loss.1} parent=0
    _
  %s5 = ssub.s32 1, %s3
  %s6 = scalar_select 0, %s5, %s3
  loop: start=0, step=1, limit=4
  $region2: #{custom_soft_dice_loss.1} parent=0 // loop_pre_header
    _
  $region3: #{custom_soft_dice_loss.1} parent=0 // loop_header
    %s8 = sphi 0, %s12
    %p9 = scmp.ge.s32.totalorder %s8, 4
    %s15 = sphi 0, %s34
    %s16 = sphi 0, %s30
    %s17 = sphi 0, %s26
    %s18 = sphi 0, %s15
    %s19 = sphi 0, %s16
    %s20 = sphi 0, %s17
    %s21 = sphi 0, %s18
    %s22 = sphi 0, %s19
    %s23 = sphi 0, %s20
    %s41 = sphi 0, %s43
    %s44 = sphi 0, %s41
    %s45 = sphi 0, %s44
    %s61 = sphi 0, %s45
    %s71 = sphi 0, %s73
    %s74 = sphi 0, %s71
    %s75 = sphi 0, %s74
    %s91 = sphi 0, %s75
    %s99 = sphi 0, %s101
    %s102 = sphi 0, %s99
    %s103 = sphi 0, %s102
    %s119 = sphi 0, %s103
  $region4: #{custom_soft_dice_loss.1} parent=0 // loop_header_branch
    %11 = sbr.rel (%p9) target = $region8
  $region5: #{custom_soft_dice_loss.1} parent=0 // loop_body
    %s13 = ssub.s32 %s8, 1
    %s14 = ssub.s32 %s8, 2
    %s24 = sadd.s32 1, %s17
    %p25 = scmp.ge.s32.totalorder %s24, 1
    %s26 = scalar_select %p25, 0, %s24
    %s27 = sadd.s32 1, %s16
    %s28 = scalar_select %p25, %s27, %s16
    %p29 = scmp.ge.s32.totalorder %s28, 2
    %s30 = scalar_select %p29, 0, %s28
    %s31 = sadd.s32 1, %s15
    %s32 = scalar_select %p29, %s31, %s15
    %p33 = scmp.ge.s32.totalorder %s32, 1
    %s34 = scalar_select %p33, 0, %s32
    %s35 = sadd.s32 %s15, %s17
    %s36 = sadd.s32 %s34, %s26
    %s37 = ssub.s32 %s16, %s30
    %s38 = ssub.s32 %s35, %s36
    %s39 = sor.u32 %s37, %s38
    %p40 = scmp.eq.s32.totalorder %s39, 0
    %s42 = sadd.s32 %s41, 1
    %s43 = scalar_select %p40, %s41, %s42
    %p46 = pneg %p40
    %p47 = scmp.eq.s32.totalorder %s8, 1
    %p48 = por %p46, %p47
    %p49 = scmp.ne.s32.totalorder %s41, %s44
    %p50 = scmp.eq.s32.totalorder %s8, 0
    %p51 = por %p49, %p50
    %p52 = scmp.ne.s32.totalorder %s41, %s44
    %p53 = scmp.eq.s32.totalorder %s13, 1
    %p54 = por %p52, %p53
    %p55 = scmp.ne.s32.totalorder %s44, %s45
    %p56 = scmp.eq.s32.totalorder %s13, 0
    %p57 = por %p55, %p56
    %p58 = scmp.ne.s32.totalorder %s44, %s45
    %p59 = scmp.eq.s32.totalorder %s14, 1
    %p60 = por %p58, %p59
    %p62 = scmp.ne.s32.totalorder %s45, %s61
    %p63 = scmp.eq.s32.totalorder %s14, 0
    %p64 = por %p62, %p63
    %s65 = sadd.s32 %s15, %s17
    %s66 = sadd.s32 %s34, %s26
    %s67 = ssub.s32 %s16, %s30
    %s68 = ssub.s32 %s65, %s66
    %s69 = sor.u32 %s67, %s68
    %p70 = scmp.eq.s32.totalorder %s69, 0
    %s72 = sadd.s32 %s71, 1
    %s73 = scalar_select %p70, %s71, %s72
    %p76 = pneg %p70
    %p77 = scmp.eq.s32.totalorder %s8, 1
    %p78 = por %p76, %p77
    %p79 = scmp.ne.s32.totalorder %s71, %s74
    %p80 = scmp.eq.s32.totalorder %s8, 0
    %p81 = por %p79, %p80
    %p82 = scmp.ne.s32.totalorder %s71, %s74
    %p83 = scmp.eq.s32.totalorder %s13, 1
    %p84 = por %p82, %p83
    %p85 = scmp.ne.s32.totalorder %s74, %s75
    %p86 = scmp.eq.s32.totalorder %s13, 0
    %p87 = por %p85, %p86
    %p88 = scmp.ne.s32.totalorder %s74, %s75
    %p89 = scmp.eq.s32.totalorder %s14, 1
    %p90 = por %p88, %p89
    %p92 = scmp.ne.s32.totalorder %s75, %s91
    %p93 = scmp.eq.s32.totalorder %s14, 0
    %p94 = por %p92, %p93
    %s95 = ssub.s32 %s15, %s34
    %s96 = ssub.s32 %s16, %s30
    %s97 = sor.u32 %s95, %s96
    %p98 = scmp.eq.s32.totalorder %s97, 0
    %s100 = sadd.s32 %s99, 1
    %s101 = scalar_select %p98, %s99, %s100
    %p104 = pneg %p98
    %p105 = scmp.eq.s32.totalorder %s8, 1
    %p106 = por %p104, %p105
    %p107 = scmp.ne.s32.totalorder %s99, %s102
    %p108 = scmp.eq.s32.totalorder %s8, 0
    %p109 = por %p107, %p108
    %p110 = scmp.ne.s32.totalorder %s99, %s102
    %p111 = scmp.eq.s32.totalorder %s13, 1
    %p112 = por %p110, %p111
    %p113 = scmp.ne.s32.totalorder %s102, %s103
    %p114 = scmp.eq.s32.totalorder %s13, 0
    %p115 = por %p113, %p114
    %p116 = scmp.ne.s32.totalorder %s102, %s103
    %p117 = scmp.eq.s32.totalorder %s14, 1
    %p118 = por %p116, %p117
    %p120 = scmp.ne.s32.totalorder %s103, %s119
    %p121 = scmp.eq.s32.totalorder %s14, 0
    %p122 = por %p120, %p121
    %p123 = scmp.le.s32.totalorder 1, %s8
    %p124 = scmp.lt.s32.totalorder %s8, 3
    %p125 = pnand %p123, %p124
    %p126 = pneg %p125
    // Predicated region
    $region9: #{custom_soft_dice_loss.1} parent=5 // pred_check
      _
    $region10: #{custom_soft_dice_loss.1} parent=5 // pred_check_branch
      %128 = sbr.rel (%p125) target = $region12
    $region11: #{custom_soft_dice_loss.1} parent=5 // pred_region
      %s129 = ssub.s32 %s8, 1
    $region12: #{custom_soft_dice_loss.1} parent=5 // pred_fallthru
      _
    %p130 = scmp.lt.s32.totalorder %s8, 2
    // Predicated region
    $region13: #{custom_soft_dice_loss.1} parent=5 // pred_check
      %p131 = pneg %p130
    $region14: #{custom_soft_dice_loss.1} parent=5 // pred_check_branch
      %133 = sbr.rel (%p131) target = $region16
    $region15: #{custom_soft_dice_loss.1} parent=5 // pred_region
      // Predicated region
      $region17: #{custom_soft_dice_loss.1} parent=15 // pred_check
        %p134 = pneg %p51
      $region18: #{custom_soft_dice_loss.1} parent=15 // pred_check_branch
        %136 = sbr.rel (%p134) target = $region20
      $region19: #{custom_soft_dice_loss.1} parent=15 // pred_region
        %s137 = sadd.s32 %s15, %s17
        %p138 = scmp.lt.s32.totalorder %s16, 1
        %s139 = scalar_select %p138, %s16, 1
        %p140 = scmp.lt.s32.totalorder %s137, 0
        %s141 = scalar_select %p140, %s137, 0
        %s142 = smul.addr %s139, 3
        %s143 = sadd.s32 %s141, %s142
        %s144 = smul.addr %s143, 2
        %s145 = scalar_lea.vmem %s0, %s144
        %s146 = sadd.s32 %s15, %s17
      $region20: #{custom_soft_dice_loss.1} parent=15 // pred_fallthru
        _
      // Predicated region
      $region21: #{custom_soft_dice_loss.1} parent=15 // pred_check
        %p147 = pneg %p81
      $region22: #{custom_soft_dice_loss.1} parent=15 // pred_check_branch
        %149 = sbr.rel (%p147) target = $region24
      $region23: #{custom_soft_dice_loss.1} parent=15 // pred_region
        %s150 = sadd.s32 %s15, %s17
        %p151 = scmp.lt.s32.totalorder %s16, 1
        %s152 = scalar_select %p151, %s16, 1
        %p153 = scmp.lt.s32.totalorder %s150, 0
        %s154 = scalar_select %p153, %s150, 0
        %s155 = sadd.s32 %s154, %s152
        %s156 = scalar_lea.vmem %s1, %s155
        %s157 = sadd.s32 %s15, %s17
      $region24: #{custom_soft_dice_loss.1} parent=15 // pred_fallthru
        _
    $region16: #{custom_soft_dice_loss.1} parent=5 // pred_fallthru
      _
    %p158 = scmp.le.s32.totalorder 1, %s8
    %p159 = scmp.lt.s32.totalorder %s8, 3
    %p160 = pnand %p158, %p159
    %p161 = pneg %p160
    // Predicated region
    $region25: #{custom_soft_dice_loss.1} parent=5 // pred_check
      _
    $region26: #{custom_soft_dice_loss.1} parent=5 // pred_check_branch
      %163 = sbr.rel (%p160) target = $region28
    $region27: #{custom_soft_dice_loss.1} parent=5 // pred_region
      %s164 = ssub.s32 %s8, 1
      %s165 = sadd.s32 %s18, %s20
      %p166 = scmp.lt.s32.totalorder %s19, 1
      %s167 = scalar_select %p166, %s19, 1
      %p168 = scmp.lt.s32.totalorder %s165, 0
      %s169 = scalar_select %p168, %s165, 0
      %s170 = smul.addr %s167, 3
      %s171 = sadd.s32 %s169, %s170
      %s172 = smul.addr %s171, 2
      %s173 = scalar_lea.vmem %s0, %s172
      %p174 = pneg %p57
      %p175 = pneg %p54
      %s176 = sadd.s32 %s18, %s20
      %p177 = scmp.lt.s32.totalorder %s19, 1
      %s178 = scalar_select %p177, %s19, 1
      %p179 = scmp.lt.s32.totalorder %s176, 0
      %s180 = scalar_select %p179, %s176, 0
      %s181 = sadd.s32 %s180, %s178
      %s182 = scalar_lea.vmem %s1, %s181
      %p183 = pneg %p87
      %p184 = pneg %p84
      %p185 = pneg %p115
      %p186 = pneg %p112
      %p187 = scmp.lt.s32.totalorder %s18, 0
      %s188 = scalar_select %p187, %s18, 0
      %p189 = scmp.lt.s32.totalorder %s19, 1
      %s190 = scalar_select %p189, %s19, 1
      %s191 = smul.addr %s190, 3
      %s192 = smul.addr %s188, 6
      %s193 = sadd.s32 %s191, %s192
      %s194 = smul.addr %s193, 4
      %s195 = scalar_lea.vmem %s2, %s194
      %s196 = sadd.s32 %s18, %s20
      %p197 = scmp.lt.s32.totalorder %s19, 1
      %s198 = scalar_select %p197, %s19, 1
      %p199 = scmp.lt.s32.totalorder %s196, 0
      %s200 = scalar_select %p199, %s196, 0
      %s201 = smul.addr %s198, 3
      %s202 = sadd.s32 %s200, %s201
      %s203 = smul.addr %s202, 2
      %s204 = scalar_lea.vmem %s0, %s203
      %s205 = sadd.s32 %s18, %s20
      %s206 = sadd.s32 %s18, %s20
      %p207 = scmp.lt.s32.totalorder %s19, 1
      %s208 = scalar_select %p207, %s19, 1
      %p209 = scmp.lt.s32.totalorder %s206, 0
      %s210 = scalar_select %p209, %s206, 0
      %s211 = sadd.s32 %s210, %s208
      %s212 = scalar_lea.vmem %s1, %s211
      %s213 = sadd.s32 %s18, %s20
      %p214 = scmp.lt.s32.totalorder %s18, 0
      %s215 = scalar_select %p214, %s18, 0
      %p216 = scmp.lt.s32.totalorder %s19, 1
      %s217 = scalar_select %p216, %s19, 1
      %s218 = smul.addr %s217, 3
      %s219 = smul.addr %s215, 6
      %s220 = sadd.s32 %s218, %s219
      %s221 = smul.addr %s220, 4
      %s222 = scalar_lea.vmem %s2, %s221
      %p223 = scmp.eq.s32.totalorder %s20, 0
      // Predicated region
      $region29: #{custom_soft_dice_loss.1} parent=27 // pred_check
        %p224 = pneg %p223
      $region30: #{custom_soft_dice_loss.1} parent=27 // pred_check_branch
        %226 = sbr.rel (%p224) target = $region32
      $region31: #{custom_soft_dice_loss.1} parent=27 // pred_region
        %227 = vst [vmem:[%s222] sm:$0x7] 0.0
        %228 = vst [vmem:[%s222 + $0x4] sm:$0x7] 0.0
        %229 = vst [vmem:[%s222 + $0x8] sm:$0x7] 0.0
      $region32: #{custom_soft_dice_loss.1} parent=27 // pred_fallthru
        _
      %v230 = vld [vmem:[%s204] sm:$0x3]
      %v231 = vld [vmem:[%s204 + $0x2] sm:$0x3]
      %v232 = vld [vmem:[%s204 + $0x4] sm:$0x3]
      %v233 = vld [vmem:[%s212] sm:$0x1]
      %v234 = vunpack.c.0.s8 %v233
      %vm235 = vcmask 1041408
      %v236 = vsel %vm235, %v230, -inf
      %v237 = vsel %vm235, %v231, -inf
      %v238 = vsel %vm235, %v232, -inf
      %v239 = vmax.f32 %v236, %v237
      %v240 = vmax.f32 %v239, %v238
      %v241 = vsub.f32 %v230, %v240
      %v242 = vsub.f32 %v231, %v240
      %v243 = vsub.f32 %v232, %v240
      %v244 = vmul.f32 %v241, 1.442695
      %v245 = vpow.pop %v244
      %v246 = vmul.f32 %v242, 1.442695
      %v247 = vpow.pop %v246
      %v248 = vmul.f32 %v243, 1.442695
      %v249 = vpow.pop %v248
      %v250 = vsel %vm235, %v245, 0.0
      %v251 = vsel %vm235, %v247, 0.0
      %v252 = vadd.f32 %v250, %v251
      %v253 = vsel %vm235, %v249, 0.0
      %v254 = vadd.f32 %v252, %v253
      %v255 = vrcp.pop %v254
      %v256 = vmul.f32 1.0, %v255
      %v257 = vmul.f32 %v245, %v256
      %vm258 = vcmp.eq.s32.totalorder %v234, 1
      %v259 = vsel %vm258, %v257, 0.0
      %v260 = vsel %vm235, %v259, 0.0
      %v261 = vrot.slane %v260, 4
      %v262 = vadd.f32 %v260, %v261
      %v263 = vrot.slane %v262, 2
      %v264 = vadd.f32 %v262, %v263
      %v265 = vrot.slane %v264, 1
      %v266 = vadd.f32 %v264, %v265
      %v267 = vsel %vm235, %v257, 0.0
      %v268 = vrot.slane %v267, 4
      %v269 = vadd.f32 %v267, %v268
      %v270 = vrot.slane %v269, 2
      %v271 = vadd.f32 %v269, %v270
      %v272 = vrot.slane %v271, 1
      %v273 = vadd.f32 %v271, %v272
      %v274 = vsel %vm258, 1, 0
      %v275 = vcvt.s32.f32 %v274
      %v276 = vsel %vm235, %v275, 0.0
      %v277 = vrot.slane %v276, 4
      %v278 = vadd.f32 %v276, %v277
      %v279 = vrot.slane %v278, 2
      %v280 = vadd.f32 %v278, %v279
      %v281 = vrot.slane %v280, 1
      %v282 = vadd.f32 %v280, %v281
      %v283 = vmul.f32 %v247, %v256
      %vm284 = vcmp.eq.s32.totalorder %v234, 2
      %v285 = vsel %vm284, %v283, 0.0
      %v286 = vsel %vm235, %v285, 0.0
      %v287 = vrot.slane %v286, 4
      %v288 = vadd.f32 %v286, %v287
      %v289 = vrot.slane %v288, 2
      %v290 = vadd.f32 %v288, %v289
      %v291 = vrot.slane %v290, 1
      %v292 = vadd.f32 %v290, %v291
      %v293 = vsel %vm235, %v283, 0.0
      %v294 = vrot.slane %v293, 4
      %v295 = vadd.f32 %v293, %v294
      %v296 = vrot.slane %v295, 2
      %v297 = vadd.f32 %v295, %v296
      %v298 = vrot.slane %v297, 1
      %v299 = vadd.f32 %v297, %v298
      %v300 = vsel %vm284, 1, 0
      %v301 = vcvt.s32.f32 %v300
      %v302 = vsel %vm235, %v301, 0.0
      %v303 = vrot.slane %v302, 4
      %v304 = vadd.f32 %v302, %v303
      %v305 = vrot.slane %v304, 2
      %v306 = vadd.f32 %v304, %v305
      %v307 = vrot.slane %v306, 1
      %v308 = vadd.f32 %v306, %v307
      %v309 = vmul.f32 %v249, %v256
      %vm310 = vcmp.eq.s32.totalorder %v234, 3
      %v311 = vsel %vm310, %v309, 0.0
      %v312 = vsel %vm235, %v311, 0.0
      %v313 = vrot.slane %v312, 4
      %v314 = vadd.f32 %v312, %v313
      %v315 = vrot.slane %v314, 2
      %v316 = vadd.f32 %v314, %v315
      %v317 = vrot.slane %v316, 1
      %v318 = vadd.f32 %v316, %v317
      %v319 = vsel %vm235, %v309, 0.0
      %v320 = vrot.slane %v319, 4
      %v321 = vadd.f32 %v319, %v320
      %v322 = vrot.slane %v321, 2
      %v323 = vadd.f32 %v321, %v322
      %v324 = vrot.slane %v323, 1
      %v325 = vadd.f32 %v323, %v324
      %v326 = vsel %vm310, 1, 0
      %v327 = vcvt.s32.f32 %v326
      %v328 = vsel %vm235, %v327, 0.0
      %v329 = vrot.slane %v328, 4
      %v330 = vadd.f32 %v328, %v329
      %v331 = vrot.slane %v330, 2
      %v332 = vadd.f32 %v330, %v331
      %v333 = vrot.slane %v332, 1
      %v334 = vadd.f32 %v332, %v333
      %vm335 = vcmask 1040384
      %v336 = vsel %vm335, %v266, %v292
      %v337 = vsel %vm235, %v336, %v318
      %v338 = vsel %vm335, %v273, %v299
      %v339 = vsel %vm235, %v338, %v325
      %v340 = vsel %vm335, %v282, %v308
      %v341 = vsel %vm235, %v340, %v334
      %v342 = vld [vmem:[%s222] sm:$0x7]
      %v343 = vld [vmem:[%s222 + $0x4] sm:$0x7]
      %v344 = vld [vmem:[%s222 + $0x8] sm:$0x7]
      %v345 = vadd.f32 %v342, %v337
      %v346 = vadd.f32 %v343, %v339
      %v347 = vadd.f32 %v344, %v341
      %348 = vst [vmem:[%s222] sm:$0x7] %v345
      %349 = vst [vmem:[%s222 + $0x4] sm:$0x7] %v346
      %350 = vst [vmem:[%s222 + $0x8] sm:$0x7] %v347
      %p351 = scmp.lt.s32.totalorder %s18, 0
      %s352 = scalar_select %p351, %s18, 0
      %p353 = scmp.lt.s32.totalorder %s19, 1
      %s354 = scalar_select %p353, %s19, 1
      %s355 = smul.addr %s354, 3
      %s356 = smul.addr %s352, 6
      %s357 = sadd.s32 %s355, %s356
      %s358 = smul.addr %s357, 4
      %s359 = scalar_lea.vmem %s2, %s358
      // Predicated region
      $region33: #{custom_soft_dice_loss.1} parent=27 // pred_check
        %p360 = pneg %p112
      $region34: #{custom_soft_dice_loss.1} parent=27 // pred_check_branch
        %362 = sbr.rel (%p360) target = $region36
      $region35: #{custom_soft_dice_loss.1} parent=27 // pred_region
        _
      $region36: #{custom_soft_dice_loss.1} parent=27 // pred_fallthru
        _
    $region28: #{custom_soft_dice_loss.1} parent=5 // pred_fallthru
      _
    %p363 = scmp.le.s32.totalorder 2, %s8
    // Predicated region
    $region37: #{custom_soft_dice_loss.1} parent=5 // pred_check
      %p364 = pneg %p363
    $region38: #{custom_soft_dice_loss.1} parent=5 // pred_check_branch
      %366 = sbr.rel (%p364) target = $region40
    $region39: #{custom_soft_dice_loss.1} parent=5 // pred_region
      %s367 = ssub.s32 %s8, 2
      // Predicated region
      $region41: #{custom_soft_dice_loss.1} parent=39 // pred_check
        %p368 = pneg %p118
      $region42: #{custom_soft_dice_loss.1} parent=39 // pred_check_branch
        %370 = sbr.rel (%p368) target = $region44
      $region43: #{custom_soft_dice_loss.1} parent=39 // pred_region
        %p371 = scmp.lt.s32.totalorder %s21, 0
        %s372 = scalar_select %p371, %s21, 0
        %p373 = scmp.lt.s32.totalorder %s22, 1
        %s374 = scalar_select %p373, %s22, 1
        %s375 = smul.addr %s374, 3
        %s376 = smul.addr %s372, 6
        %s377 = sadd.s32 %s375, %s376
        %s378 = smul.addr %s377, 4
        %s379 = scalar_lea.vmem %s2, %s378
      $region44: #{custom_soft_dice_loss.1} parent=39 // pred_fallthru
        _
    $region40: #{custom_soft_dice_loss.1} parent=5 // pred_fallthru
      _
  $region6: #{custom_soft_dice_loss.1} parent=0 // loop_footer
    %s12 = sadd.s32 1, %s8
  $region7: #{custom_soft_dice_loss.1} parent=0 // loop_footer_branch
    %7 = sbr.rel target = $region3
  $region8: #{custom_soft_dice_loss.1} parent=0 // loop_exit
    _

</llo_original>
